<compile_context>
chip_gen: v7x
topology: tpu7x:2x2x1
jax: 0.10.0
libtpu: 0.0.40
codegen_flags: <defaults>
</compile_context>

<pallas_src>
import jax
import jax.numpy as jnp
from jax.experimental import pallas as pl
from jax.experimental.pallas import tpu as pltpu

_LANE = 128
_SUBLANES_32BIT = 8
# 2 MiB per tile -> in/out double-buffered = 8 MiB total; safe under the
# smallest default scoped-VMEM limit of any generation (16 MiB on v5e).
_TILE_BYTES_CAP = 2 * 1024 * 1024
_TOTAL_VMEM_BUDGET = 12 * 1024 * 1024


def _identity_kernel(img_ref, out_ref):
    # Whole-tile load + store; this IS the forward pass of ExampleModel.
    out_ref[...] = img_ref[...]


def _sublane_min(dtype):
    """Minimum sublane tile so packed sub-32-bit dtypes stay dense: 8/16/32."""
    itemsize = jnp.dtype(dtype).itemsize
    return _SUBLANES_32BIT * max(1, 4 // itemsize)


def _choose_flat_shape(shape, dtype):
    """Lane-dense 2D flattening (cols a multiple of 128), or None to bail."""
    total = 1
    for d in shape:
        total *= int(d)
    if total % _LANE != 0:
        return None  # no clean factorization -> pure-JAX identity
    cols = _LANE
    while total % (cols * 2) == 0 and cols * 2 <= 2048:
        cols *= 2
    return total // cols, cols


def _choose_tile(rows, cols, dtype):
    """Dtype-aware tile sizes that divide evenly and respect (8, 128)."""
    itemsize = jnp.dtype(dtype).itemsize
    # Small input: one whole-array block, grid=(1,1) -> minimal steps/DMAs.
    if rows * cols * itemsize <= _TILE_BYTES_CAP:
        return rows, cols

    smin = _sublane_min(dtype)
    tm_cap = 512 * max(1, 4 // itemsize)  # keeps tile bytes ~2 MiB
    tn_cap = 1024

    if rows % smin != 0:
        tm = rows  # full-extent block dim (legal); size checked by caller
    else:
        tm = smin
        while rows % (tm * 2) == 0 and tm * 2 <= tm_cap:
            tm *= 2

    tn = _LANE
    while cols % (tn * 2) == 0 and tn * 2 <= tn_cap:
        tn *= 2
    return tm, tn


def example_model_forward(img, img_metas=None, test_mode=False,
                          use_pallas_copy=False, **kwargs):
    """ExampleModel.forward: identity pass-through of `img`.

    Default path returns `img` unchanged (optimal: zero HBM traffic, zero
    launch overhead).  `use_pallas_copy=True` routes through the Pallas
    identity-copy kernel, kept for framework plumbing / kernel validation.
    """
    if not use_pallas_copy:
        return img

    flat_shape = _choose_flat_shape(img.shape, img.dtype)
    if flat_shape is None:
        return img  # no lane-dense layout -> don't waste vregs on masked vst

    rows, cols = flat_shape
    tm, tn = _choose_tile(rows, cols, img.dtype)

    itemsize = jnp.dtype(img.dtype).itemsize
    # 2x double-buffered input + 2x output tiles must fit the scoped budget;
    # otherwise (pathological odd row counts) just do the free identity.
    if 4 * tm * tn * itemsize > _TOTAL_VMEM_BUDGET:
        return img

    flat = img.reshape(rows, cols)
    grid = (rows // tm, cols // tn)

    out_flat = pl.pallas_call(
        _identity_kernel,
        out_shape=jax.ShapeDtypeStruct(flat.shape, flat.dtype),
        grid_spec=pl.GridSpec(
            grid=grid,
            in_specs=[pl.BlockSpec((tm, tn), lambda i, j: (i, j))],
            out_specs=pl.BlockSpec((tm, tn), lambda i, j: (i, j)),
        ),
        # 2x bytes: the copy kernel reads + writes every element once.
        cost_estimate=pl.CostEstimate(
            flops=0,
            transcendentals=0,
            bytes_accessed=2 * img.size * itemsize,
        ),
        compiler_params=pltpu.CompilerParams(
            dimension_semantics=("parallel", "parallel"),
        ),
    )(flat)

    return out_flat.reshape(img.shape)


def init_params(key):
    """Deterministic init of the Conv2d(3, 3, 3) params declared in __init__."""
    kw, kb = jax.random.split(key)
    weight = jax.random.normal(kw, (3, 3, 3, 3), dtype=jnp.float32) * 0.1
    bias = jax.random.normal(kb, (3,), dtype=jnp.float32) * 0.1
    # TODO(synk): self.conv is defined in ExampleModel.__init__ but never used
    # in forward(); parameters are initialized here only to mirror the module.
    return {"conv_weight": weight, "conv_bias": bias}


if __name__ == "__main__":
    key = jax.random.PRNGKey(0)
    k_img, k_params = jax.random.split(key)

    # NCHW batch consistent with Conv2d(3, 3, 3): (N=2, C=3, H=16, W=16)
    img = jax.random.normal(k_img, (2, 3, 16, 16), dtype=jnp.float32)
    img_metas = [{"ori_shape": (16, 16, 3)} for _ in range(2)]

    params = init_params(k_params)  # deterministic; unused by forward

    # Fast path (the optimal implementation of an identity forward).
    out_fast = example_model_forward(img, img_metas)
    out_fast = jax.block_until_ready(out_fast)

    # Pallas plumbing path, exercised once on TPU.
    out_pallas = example_model_forward(img, img_metas, use_pallas_copy=True)
    out_pallas = jax.block_until_ready(out_pallas)

    assert out_fast.shape == img.shape and out_fast.dtype == img.dtype
    assert out_pallas.shape == img.shape and out_pallas.dtype == img.dtype
    assert bool(jnp.all(out_fast == img))
    assert bool(jnp.all(out_pallas == img))
    print("KERNEL_OK")
</pallas_src>

<mosaic_0001>
module attributes {stable_mosaic.version = 11 : i64} {
  func.func @_identity_kernel(%arg0: i32, %arg1: i32, %arg2: memref<3x512xf32, #tpu.memory_space<vmem>>, %arg3: memref<3x512xf32, #tpu.memory_space<vmem>>) attributes {dimension_semantics = [#tpu.dimension_semantics<parallel>, #tpu.dimension_semantics<parallel>], iteration_bounds = array<i64: 1, 1>, scalar_prefetch = 0 : i64, scratch_operands = 0 : i64, tpu.core_type = #tpu.core_type<tc>, window_params = [{transform_indices = @transform_0, window_bounds = array<i64: 3, 512>}, {transform_indices = @transform_1, window_bounds = array<i64: 3, 512>}]} {
    %c0 = arith.constant 0 : index
    %c0_0 = arith.constant 0 : index
    %0 = vector.load %arg2[%c0, %c0_0] : memref<3x512xf32, #tpu.memory_space<vmem>>, vector<3x512xf32>
    %c0_1 = arith.constant 0 : index
    %c0_2 = arith.constant 0 : index
    %1 = vector.load %arg3[%c0_1, %c0_2] : memref<3x512xf32, #tpu.memory_space<vmem>>, vector<3x512xf32>
    tpu.vector_store %arg3[%c0_1, %c0_2], %0 {strides = array<i32>} : memref<3x512xf32, #tpu.memory_space<vmem>>, vector<3x512xf32>,
    return
  }
  func.func @transform_0(%arg0: i32, %arg1: i32) -> (i32, i32) {
    %c0_i32 = arith.constant 0 : i32
    return %arg0, %arg1 : i32, i32
  }
  func.func @transform_1(%arg0: i32, %arg1: i32) -> (i32, i32) {
    %c0_i32 = arith.constant 0 : i32
    return %arg0, %arg1 : i32, i32
  }
}

</mosaic_0001>

<llo_original>
// kernel: tpu_custom_call.1
$region0: #{tpu_custom_call.1}
  #allocation0 [shape = 'u32[]', space=smem, size = 0x4, offset = 0x4, fixed_abs, tag = 'smem constant byte address 0x4 - core index']
  #allocation1 [shape = 'u32[144,128]{1,0:T(1,128)}', space=vmem, size = 0x12000, scoped, tag = 'internal scratch']
  %s0 = inlined_call_operand.hbm [shape: f32[3,512], index: 0, kind: input, shape index: {}]
  %s1 = inlined_call_operand.hbm [shape: f32[3,512], index: 1, kind: output, shape index: {}]
  %s2 = sld [smem:[#allocation0]]
  $region18: #{tpu_custom_call.1} parent=0
    _
  %s4 = ssub.s32 1, %s2
  %s5 = scalar_select 0, %s4, %s2
  $region1: #{tpu_custom_call.1} parent=0
    #allocation2 [shape = 'u8[8192]{0}', space=vmem, size = 0x2000, scoped, tag = 'input window, operand 0, single buffered']
    #allocation3 [shape = 's32[1]{0}', space=sflag, size = 0x4, scoped, tag = 'scoped memory for tpu_custom_call.1']
    #allocation4 [shape = 's32[1]{0}', space=sflag, size = 0x4, scoped, tag = 'scoped memory for tpu_custom_call.1']
    #allocation5 [shape = 'u8[8192]{0}', space=vmem, size = 0x2000, scoped, tag = 'output window, operand 0, single buffered']
    %6 = vsyncpa [#allocation3], 0
    %7 = vsyncpa [#allocation4], 0
    // Predicated region
    $region2: #{tpu_custom_call.1} parent=1 // pred_check
      _
    $region3: #{tpu_custom_call.1} parent=1 // pred_check_branch
      %9 = sbr.rel (0) target = $region5
    $region4: #{tpu_custom_call.1} parent=1 // pred_region
      %s11 = ssub.s32 256, 256
      %12 = vsyncadd [#allocation3], %s11
      %s14 = sshll.u32 [#allocation2], 4
      %s15 = int_to_ptr.vmem [resolvable:$true] %s14
      %17 = dma.hbm_to_vmem [thread:$0]  %s0, 256, %s15, [#allocation3]
    $region5: #{tpu_custom_call.1} parent=1 // pred_fallthru
      _
    // Predicated region
    $region6: #{tpu_custom_call.1} parent=1 // pred_check
      _
    $region7: #{tpu_custom_call.1} parent=1 // pred_check_branch
      %19 = sbr.rel (0) target = $region9
    $region8: #{tpu_custom_call.1} parent=1 // pred_region
      %20 = dma.done [#allocation3], 256
    $region9: #{tpu_custom_call.1} parent=1 // pred_fallthru
      _
    %v21 = vld [vmem:[#allocation2] sm:$0x77]
    %v22 = vld [vmem:[#allocation2 + $0x8] sm:$0x77]
    %23 = vst [vmem:[#allocation5] sm:$0x77] %v21
    %24 = vst [vmem:[#allocation5 + $0x8] sm:$0x77] %v22
    // Predicated region
    $region10: #{tpu_custom_call.1} parent=1 // pred_check
      _
    $region11: #{tpu_custom_call.1} parent=1 // pred_check_branch
      %26 = sbr.rel (0) target = $region13
    $region12: #{tpu_custom_call.1} parent=1 // pred_region
      %s28 = ssub.s32 256, 256
      %29 = vsyncadd [#allocation4], %s28
      %s31 = sshll.u32 [#allocation5], 4
      %s32 = int_to_ptr.vmem [resolvable:$true] %s31
      %34 = dma.vmem_to_hbm [thread:$0]  %s32, 256, %s1, [#allocation4]
    $region13: #{tpu_custom_call.1} parent=1 // pred_fallthru
      _
    // Predicated region
    $region14: #{tpu_custom_call.1} parent=1 // pred_check
      _
    $region15: #{tpu_custom_call.1} parent=1 // pred_check_branch
      %36 = sbr.rel (0) target = $region17
    $region16: #{tpu_custom_call.1} parent=1 // pred_region
      %37 = dma.done [#allocation4], 256
    $region17: #{tpu_custom_call.1} parent=1 // pred_fallthru
      _
    %38 = vsyncpa [#allocation3], 1
    %39 = vsyncpa [#allocation4], 1

</llo_original>
